<compile_context>
chip_gen: v7x
topology: tpu7x:2x2x1
jax: 0.10.0
libtpu: 0.0.40
codegen_flags: <defaults>
</compile_context>

<pallas_src>
import functools

import numpy as np
import jax
import jax.numpy as jnp
from jax import lax
from jax.experimental import pallas as pl
from jax.experimental.pallas import tpu as pltpu


# ------------------------------ small helpers ------------------------------

def _pair(v):
    if isinstance(v, (tuple, list)):
        assert len(v) == 2
        return int(v[0]), int(v[1])
    return int(v), int(v)


def _out_size(in_size, k, s, ceil_mode):
    """PyTorch pooling output size (padding=0, dilation=1)."""
    if ceil_mode:
        out = -(-(in_size - k) // s) + 1  # ceil division
    else:
        out = (in_size - k) // s + 1
    # last window must start inside the input
    if ceil_mode and (out - 1) * s >= in_size:
        out -= 1
    return out


def _pool_matrix(in_size, out_size, k, s):
    """Banded (in_size, out_size) matrix.  Column `o` holds k/count over the
    clipped window [o*s, min(o*s+k, in_size)), so  x @ M  equals
    avg_pool(x, pad=0) * k  along that axis — the exact factor lp_pool2d
    needs, including the ceil_mode overhang divisor."""
    m = np.zeros((in_size, out_size), dtype=np.float32)
    for o in range(out_size):
        start = o * s
        end = min(start + k, in_size)
        m[start:end, o] = float(k) / float(end - start)
    return m


def _pow_in(x, p):
    if p == 1.0:
        return x
    if float(p).is_integer() and 2 <= int(p) <= 4:
        y = x
        for _ in range(int(p) - 1):
            y = y * x
        return y
    # Non-integer norms: NaN for negative inputs, same as torch.pow.
    return jnp.power(x, p)


def _root_out(s, p):
    if p == 1.0:
        return s
    if p == 2.0:
        return jnp.sqrt(s)
    return jnp.power(s, 1.0 / p)


def _round_up(v, m):
    return ((v + m - 1) // m) * m


def _padded_bytes(rows, cols, itemsize):
    """VMEM footprint of a (rows, cols) tile including (sublane,128) padding."""
    itemsize = max(int(itemsize), 1)
    sublane = max(8, 32 // itemsize)      # 8 for f32, 16 for bf16, 32 for int8
    return _round_up(rows, sublane) * _round_up(cols, 128) * itemsize


def _vmem_budgets():
    """(vmem_limit_bytes for this call, budget for the double-buffered blocks)."""
    cap = 64 * 1024 * 1024                 # conservative fallback (v7x per-TC)
    try:
        cap = int(pltpu.get_tpu_info().vmem_capacity_bytes)
    except Exception:
        pass
    # ~48 MiB scoped limit on v7x (64 MiB VMEM), ~96 MiB on v5e/v6e (128 MiB).
    vmem_limit = min(cap * 3 // 4, 112 * 1024 * 1024)
    block_budget = vmem_limit * 3 // 4     # headroom for constants + scratch
    return vmem_limit, block_budget


# ------------------------------- Pallas kernels ------------------------------

def _lp_pool2d_fused_kernel(x_ref, m_ref, o_ref, *, p):
    """x_ref: (nc_blk, H*W); m_ref: (H*W, Ho*Wo); o_ref: (nc_blk, Ho*Wo).
    Both pooling axes, the clipped-count divisor and kH*kW are baked into m."""
    xp = _pow_in(x_ref[...].astype(jnp.float32), p)                    # (nc, HW)
    s = jnp.dot(xp, m_ref[...], preferred_element_type=jnp.float32)    # (nc, HoWo)
    o_ref[...] = _root_out(s, p).astype(o_ref.dtype)


def _lp_pool2d_separable_kernel(x_ref, ph_ref, pw_ref, o_ref, *, p, nc_blk):
    """x_ref: (nc_blk, H, W); ph_ref: (Ho, H); pw_ref: (W, Wo);
    o_ref: (nc_blk, Ho, Wo).  Window sums + divisor are baked into ph/pw."""
    ph = ph_ref[...]  # (Ho, H)  f32
    pw = pw_ref[...]  # (W, Wo)  f32

    def plane(n):
        xp = _pow_in(x_ref[n].astype(jnp.float32), p)                  # (H, W)
        t = jnp.dot(xp, pw, preferred_element_type=jnp.float32)        # (H, Wo)
        s = jnp.dot(ph, t, preferred_element_type=jnp.float32)         # (Ho, Wo)
        o_ref[n] = _root_out(s, p).astype(o_ref.dtype)

    if nc_blk <= 8:
        for n in range(nc_blk):            # small static unroll
            plane(n)
    else:
        def body(n, carry):
            plane(n)
            return carry
        lax.fori_loop(0, nc_blk, body, 0)  # avoids vreg blow-up for big blocks


# ------------------------------ Python wrapper ------------------------------

def lp_pool2d(x, norm_type, kernel_size, stride=None, ceil_mode=False,
              _force_separable=False):
    """x: (N, C, H, W) -> (N, C, Ho, Wo); matches torch.nn.functional.lp_pool2d."""
    p = float(norm_type)
    kH, kW = _pair(kernel_size)
    sH, sW = _pair(stride) if stride is not None else (kH, kW)

    N, C, H, W = x.shape
    NC = N * C
    Ho = _out_size(H, kH, sH, ceil_mode)
    Wo = _out_size(W, kW, sW, ceil_mode)
    assert Ho >= 1 and Wo >= 1, "kernel_size larger than input"
    HW, HoWo = H * W, Ho * Wo
    itemsize = int(x.dtype.itemsize)

    vmem_limit, block_budget = _vmem_budgets()

    ph_np = _pool_matrix(H, Ho, kH, sH)    # (H, Ho)
    pw_np = _pool_matrix(W, Wo, kW, sW)    # (W, Wo)

    compiler_params = pltpu.CompilerParams(
        dimension_semantics=("parallel",),
        vmem_limit_bytes=vmem_limit,
    )

    # transcendental estimate (advisory only)
    trans = 0
    if p != 1.0:
        trans += NC * HoWo                                   # the 1/p root
    if not (float(p).is_integer() and 1 <= int(p) <= 4):
        trans += NC * HW                                     # jnp.power on input

    # Fused path only while the combined pooling matrix stays small and the
    # implied arithmetic intensity (~2*Ho*Wo flops per input element) keeps
    # the kernel HBM-bound rather than MXU-bound.
    fused = (not _force_separable
             and HW * HoWo * 4 <= 4 * 1024 * 1024
             and HoWo <= 256)

    if fused:
        # Lane-dense path: whole 2-D pooling folded into one banded matrix.
        pool_mat = jnp.asarray(np.kron(ph_np, pw_np))        # (HW, HoWo) f32
        x2 = x.reshape(NC, HW)                               # free view, no copy

        # Padding-aware block sizing (double-buffered input + output blocks),
        # counted per 8-plane sublane group.
        unit = 2 * (_padded_bytes(8, HW, itemsize) +
                    _padded_bytes(8, HoWo, itemsize))
        nc_blk = max(1, block_budget // unit) * 8
        # keep ~>=8 grid steps when there is enough work (pipeline depth and
        # v7x megacore sharding) without dropping below an 8-plane block.
        nc_blk = min(nc_blk, max(8, _round_up(-(-NC // 8), 8)))
        # (8,128) rule: second-to-last block dim must be a multiple of 8 OR
        # the full array dim.
        nc_blk = NC if nc_blk >= NC else nc_blk
        grid = (pl.cdiv(NC, nc_blk),)      # ragged final block masked by Pallas

        cost = pl.CostEstimate(
            flops=2 * NC * HW * HoWo,
            transcendentals=trans,
            bytes_accessed=NC * (HW + HoWo) * itemsize + HW * HoWo * 4,
        )

        out = pl.pallas_call(
            functools.partial(_lp_pool2d_fused_kernel, p=p),
            out_shape=jax.ShapeDtypeStruct((NC, HoWo), x.dtype),
            grid=grid,
            in_specs=[
                pl.BlockSpec((nc_blk, HW), lambda i: (i, 0)),
                pl.BlockSpec((HW, HoWo), lambda i: (0, 0)),   # constant block
            ],
            out_specs=pl.BlockSpec((nc_blk, HoWo), lambda i: (i, 0)),
            compiler_params=compiler_params,
            cost_estimate=cost,
        )(x2, pool_mat)
        return out.reshape(N, C, Ho, Wo)

    # -------------------- separable path (large planes) --------------------
    ph = jnp.asarray(ph_np.T)              # (Ho, H)
    pw = jnp.asarray(pw_np)                # (W, Wo)
    x3 = x.reshape(NC, H, W)               # free view, no copy

    plane_bytes = 2 * (_padded_bytes(H, W, itemsize) +
                       _padded_bytes(Ho, Wo, itemsize))       # double-buffered
    const_bytes = 2 * (_padded_bytes(Ho, H, 4) + _padded_bytes(W, Wo, 4))
    avail = max(block_budget - const_bytes, plane_bytes)
    nc_blk = max(1, avail // plane_bytes)
    nc_blk = min(nc_blk, max(1, -(-NC // 8)), NC)
    # TODO(synk): if a single (1, H, W) plane exceeds the VMEM budget
    # (plane_bytes > block_budget, e.g. >=2Kx2K f32 on v7x), additionally tile
    # the H axis with a (kH - sH)-row halo via the index_map.
    grid = (pl.cdiv(NC, nc_blk),)          # ragged final block masked by Pallas

    cost = pl.CostEstimate(
        flops=2 * NC * (H * W * Wo + Ho * H * Wo),
        transcendentals=trans,
        bytes_accessed=NC * (HW + HoWo) * itemsize + (Ho * H + W * Wo) * 4,
    )

    out = pl.pallas_call(
        functools.partial(_lp_pool2d_separable_kernel, p=p, nc_blk=nc_blk),
        out_shape=jax.ShapeDtypeStruct((NC, Ho, Wo), x.dtype),
        grid=grid,
        in_specs=[
            pl.BlockSpec((nc_blk, H, W), lambda i: (i, 0, 0)),
            pl.BlockSpec((Ho, H), lambda i: (0, 0)),          # constant block
            pl.BlockSpec((W, Wo), lambda i: (0, 0)),          # constant block
        ],
        out_specs=pl.BlockSpec((nc_blk, Ho, Wo), lambda i: (i, 0, 0)),
        compiler_params=compiler_params,
        cost_estimate=cost,
    )(x3, ph, pw)
    return out.reshape(N, C, Ho, Wo)


class LPPool2d:
    """Forward-only mirror of torch.nn.LPPool2d."""

    def __init__(self, norm_type, kernel_size, stride=None, ceil_mode=False):
        self.norm_type = norm_type
        self.kernel_size = kernel_size
        self.stride = stride
        self.ceil_mode = ceil_mode

    def __call__(self, x):
        return lp_pool2d(x, self.norm_type, self.kernel_size, self.stride,
                         self.ceil_mode)

    def __repr__(self):
        return (f"LPPool2d({self.norm_type}, {self.kernel_size}, "
                f"stride={self.stride}, ceil_mode={self.ceil_mode})")


# ------------------------------ numpy reference ------------------------------

def _lp_pool2d_ref(x, norm_type, kernel_size, stride=None, ceil_mode=False):
    """Pure-numpy replication of F.lp_pool2d (avg_pool2d composition)."""
    p = float(norm_type)
    kH, kW = _pair(kernel_size)
    sH, sW = _pair(stride) if stride is not None else (kH, kW)
    N, C, H, W = x.shape
    Ho = _out_size(H, kH, sH, ceil_mode)
    Wo = _out_size(W, kW, sW, ceil_mode)
    xp = np.asarray(x, dtype=np.float64) ** p
    out = np.zeros((N, C, Ho, Wo), dtype=np.float64)
    for oh in range(Ho):
        h0, h1 = oh * sH, min(oh * sH + kH, H)
        for ow in range(Wo):
            w0, w1 = ow * sW, min(ow * sW + kW, W)
            win_sum = xp[:, :, h0:h1, w0:w1].sum(axis=(2, 3))
            avg = win_sum / float((h1 - h0) * (w1 - w0))  # ATen avg_pool2d divisor
            out[:, :, oh, ow] = (avg * (kH * kW)) ** (1.0 / p)
    return out


# ------------------------------------ main ----------------------------------

if __name__ == "__main__":
    key = jax.random.PRNGKey(0)
    N, C, H, W = 2, 4, 16, 16
    x = jax.random.normal(key, (N, C, H, W), dtype=jnp.float32)
    xh = np.asarray(x)

    # 1) power-2 pool of a 3x3 window, stride 2 (docstring example) — fused path.
    m = LPPool2d(norm_type=2, kernel_size=3, stride=2)
    y = jax.block_until_ready(m(x))
    ref = _lp_pool2d_ref(xh, 2, 3, 2)
    assert y.shape == ref.shape == (N, C, 7, 7), (y.shape, ref.shape)
    np.testing.assert_allclose(np.asarray(y), ref, rtol=2e-2, atol=2e-2)

    # 2) p=1 (== avg pool * kH*kW), non-square window, ceil_mode=True
    #    (exercises the clipped-window divisor baked into the pooling matrix).
    m2 = LPPool2d(norm_type=1, kernel_size=(3, 2), stride=(2, 3), ceil_mode=True)
    y2 = jax.block_until_ready(m2(x))
    ref2 = _lp_pool2d_ref(xh, 1, (3, 2), (2, 3), ceil_mode=True)
    assert y2.shape == ref2.shape == (N, C, 8, 6), (y2.shape, ref2.shape)
    np.testing.assert_allclose(np.asarray(y2), ref2, rtol=2e-2, atol=2e-2)

    # 3) N*C (=10) not a multiple of the block size -> ragged, masked final block.
    x3 = jax.random.normal(jax.random.PRNGKey(1), (2, 5, 16, 16), dtype=jnp.float32)
    y3 = jax.block_until_ready(lp_pool2d(x3, 2, 3, 2))
    ref3 = _lp_pool2d_ref(np.asarray(x3), 2, 3, 2)
    assert y3.shape == ref3.shape == (2, 5, 7, 7), (y3.shape, ref3.shape)
    np.testing.assert_allclose(np.asarray(y3), ref3, rtol=2e-2, atol=2e-2)

    # 4) exercise the separable (large-plane) code path as well.
    y4 = jax.block_until_ready(lp_pool2d(x, 2, 3, 2, _force_separable=True))
    np.testing.assert_allclose(np.asarray(y4), ref, rtol=2e-2, atol=2e-2)

    print("KERNEL_OK")
</pallas_src>

<mosaic_0001>
module attributes {stable_mosaic.version = 11 : i64} {
  func.func @_lp_pool2d_fused_kernel(%arg0: i32, %arg1: memref<8x256xf32, #tpu.memory_space<vmem>>, %arg2: memref<256x49xf32, #tpu.memory_space<vmem>>, %arg3: memref<8x49xf32, #tpu.memory_space<vmem>>) attributes {dimension_semantics = [#tpu.dimension_semantics<parallel>], iteration_bounds = array<i64: 1>, scalar_prefetch = 0 : i64, scratch_operands = 0 : i64, tpu.core_type = #tpu.core_type<tc>, window_params = [{transform_indices = @transform_0, window_bounds = array<i64: 8, 256>}, {pipeline_mode = #tpu.pipeline_mode<synchronous>, transform_indices = @transform_1, window_bounds = array<i64: 256, 49>}, {transform_indices = @transform_2, window_bounds = array<i64: 8, 49>}]} {
    %c0 = arith.constant 0 : index
    %c0_0 = arith.constant 0 : index
    %0 = vector.load %arg1[%c0, %c0_0] : memref<8x256xf32, #tpu.memory_space<vmem>>, vector<8x256xf32>
    %1 = arith.mulf %0, %0 : vector<8x256xf32>
    %c0_1 = arith.constant 0 : index
    %c0_2 = arith.constant 0 : index
    %2 = vector.load %arg2[%c0_1, %c0_2] : memref<256x49xf32, #tpu.memory_space<vmem>>, vector<256x49xf32>
    %cst = arith.constant dense<0.000000e+00> : vector<8x49xf32>
    %3 = tpu.matmul %1, %2, %cst {dimension_numbers = #tpu.dot_dimension_numbers<[1], [0], [0], [1], [0, 0, 1, 1], [], []>} : vector<8x256xf32>, vector<256x49xf32>, vector<8x49xf32> -> vector<8x49xf32>
    %4 = math.sqrt %3 : vector<8x49xf32>
    %c0_3 = arith.constant 0 : index
    %c0_4 = arith.constant 0 : index
    %5 = vector.load %arg3[%c0_3, %c0_4] : memref<8x49xf32, #tpu.memory_space<vmem>>, vector<8x49xf32>
    tpu.vector_store %arg3[%c0_3, %c0_4], %4 {strides = array<i32>} : memref<8x49xf32, #tpu.memory_space<vmem>>, vector<8x49xf32>,
    return
  }
  func.func @transform_0(%arg0: i32) -> (i32, i32) {
    %c0_i32 = arith.constant 0 : i32
    %c0_i32_0 = arith.constant 0 : i32
    return %arg0, %c0_i32 : i32, i32
  }
  func.func @transform_1(%arg0: i32) -> (i32, i32) {
    %c0_i32 = arith.constant 0 : i32
    %c0_i32_0 = arith.constant 0 : i32
    %c0_i32_1 = arith.constant 0 : i32
    return %c0_i32, %c0_i32_0 : i32, i32
  }
  func.func @transform_2(%arg0: i32) -> (i32, i32) {
    %c0_i32 = arith.constant 0 : i32
    %c0_i32_0 = arith.constant 0 : i32
    return %arg0, %c0_i32 : i32, i32
  }
}

</mosaic_0001>

<llo_original>
// kernel: tpu_custom_call.1
$region0: #{tpu_custom_call.1}
  #allocation0 [shape = 'u32[]', space=smem, size = 0x4, offset = 0x4, fixed_abs, tag = 'smem constant byte address 0x4 - core index']
  #allocation1 [shape = 'u32[144,128]{1,0:T(1,128)}', space=vmem, size = 0x12000, scoped, tag = 'internal scratch']
  %s0 = inlined_call_operand.vmem [shape: f32[8,256], index: 0, kind: input, shape index: {}]
  %s1 = inlined_call_operand.vmem [shape: f32[256,49], index: 1, kind: input, shape index: {}]
  %s2 = inlined_call_operand.hbm [shape: f32[8,49], index: 2, kind: output, shape index: {}]
  %s3 = sld [smem:[#allocation0]]
  $region18: #{tpu_custom_call.1} parent=0
    _
  %s5 = ssub.s32 1, %s3
  %s6 = scalar_select 0, %s5, %s3
  $region1: #{tpu_custom_call.1} parent=0
    #allocation2 [shape = 'u8[4096]{0}', space=vmem, size = 0x1000, scoped, tag = 'output window, operand 0, single buffered']
    #allocation3 [shape = 's32[1]{0}', space=sflag, size = 0x4, scoped, tag = 'scoped memory for tpu_custom_call.1']
    %7 = vsyncpa [#allocation3], 0
    // Predicated region
    $region2: #{tpu_custom_call.1} parent=1 // pred_check
      _
    $region3: #{tpu_custom_call.1} parent=1 // pred_check_branch
      %9 = sbr.rel (0) target = $region5
    $region4: #{tpu_custom_call.1} parent=1 // pred_region
      _
    $region5: #{tpu_custom_call.1} parent=1 // pred_fallthru
      _
    // Predicated region
    $region6: #{tpu_custom_call.1} parent=1 // pred_check
      _
    $region7: #{tpu_custom_call.1} parent=1 // pred_check_branch
      %11 = sbr.rel (0) target = $region9
    $region8: #{tpu_custom_call.1} parent=1 // pred_region
      _
    $region9: #{tpu_custom_call.1} parent=1 // pred_fallthru
      _
    %v12 = vld [vmem:[%s0] sm:$0xff]
    %v13 = vld [vmem:[%s0 + $0x8] sm:$0xff]
    %v14 = vmul.f32 %v12, %v12
    %v15 = vmul.f32 %v13, %v13
    %v16 = vld [vmem:[%s1] sm:$0xff]
    %v17 = vld [vmem:[%s1 + $0x8] sm:$0xff]
    %v18 = vld [vmem:[%s1 + $0x10] sm:$0xff]
    %v19 = vld [vmem:[%s1 + $0x18] sm:$0xff]
    %v20 = vld [vmem:[%s1 + $0x20] sm:$0xff]
    %v21 = vld [vmem:[%s1 + $0x28] sm:$0xff]
    %v22 = vld [vmem:[%s1 + $0x30] sm:$0xff]
    %v23 = vld [vmem:[%s1 + $0x38] sm:$0xff]
    %v24 = vld [vmem:[%s1 + $0x40] sm:$0xff]
    %v25 = vld [vmem:[%s1 + $0x48] sm:$0xff]
    %v26 = vld [vmem:[%s1 + $0x50] sm:$0xff]
    %v27 = vld [vmem:[%s1 + $0x58] sm:$0xff]
    %v28 = vld [vmem:[%s1 + $0x60] sm:$0xff]
    %v29 = vld [vmem:[%s1 + $0x68] sm:$0xff]
    %v30 = vld [vmem:[%s1 + $0x70] sm:$0xff]
    %v31 = vld [vmem:[%s1 + $0x78] sm:$0xff]
    %v32 = vld [vmem:[%s1 + $0x80] sm:$0xff]
    %v33 = vld [vmem:[%s1 + $0x88] sm:$0xff]
    %v34 = vld [vmem:[%s1 + $0x90] sm:$0xff]
    %v35 = vld [vmem:[%s1 + $0x98] sm:$0xff]
    %v36 = vld [vmem:[%s1 + $0xa0] sm:$0xff]
    %v37 = vld [vmem:[%s1 + $0xa8] sm:$0xff]
    %v38 = vld [vmem:[%s1 + $0xb0] sm:$0xff]
    %v39 = vld [vmem:[%s1 + $0xb8] sm:$0xff]
    %v40 = vld [vmem:[%s1 + $0xc0] sm:$0xff]
    %v41 = vld [vmem:[%s1 + $0xc8] sm:$0xff]
    %v42 = vld [vmem:[%s1 + $0xd0] sm:$0xff]
    %v43 = vld [vmem:[%s1 + $0xd8] sm:$0xff]
    %v44 = vld [vmem:[%s1 + $0xe0] sm:$0xff]
    %v45 = vld [vmem:[%s1 + $0xe8] sm:$0xff]
    %v46 = vld [vmem:[%s1 + $0xf0] sm:$0xff]
    %v47 = vld [vmem:[%s1 + $0xf8] sm:$0xff]
    %48 = vmatprep.subr.mxu0 0.0
    %49 = vmatpush1.msra.mxu0 %v16
    %50 = vmatprep.subr.mxu0 0.0
    %51 = vmatpush1.msra.mxu0 %v17
    %52 = vmatprep.subr.mxu0 0.0
    %53 = vmatpush1.msra.mxu0 %v18
    %54 = vmatprep.subr.mxu0 0.0
    %55 = vmatpush1.msra.mxu0 %v19
    %56 = vmatprep.subr.mxu0 0.0
    %57 = vmatpush1.msra.mxu0 %v20
    %58 = vmatprep.subr.mxu0 0.0
    %59 = vmatpush1.msra.mxu0 %v21
    %60 = vmatprep.subr.mxu0 0.0
    %61 = vmatpush1.msra.mxu0 %v22
    %62 = vmatprep.subr.mxu0 0.0
    %63 = vmatpush1.msra.mxu0 %v23
    %64 = vmatprep.subr.mxu0 0.0
    %65 = vmatpush1.msra.mxu0 %v24
    %66 = vmatprep.subr.mxu0 0.0
    %67 = vmatpush1.msra.mxu0 %v25
    %68 = vmatprep.subr.mxu0 0.0
    %69 = vmatpush1.msra.mxu0 %v26
    %70 = vmatprep.subr.mxu0 0.0
    %71 = vmatpush1.msra.mxu0 %v27
    %72 = vmatprep.subr.mxu0 0.0
    %73 = vmatpush1.msra.mxu0 %v28
    %74 = vmatprep.subr.mxu0 0.0
    %75 = vmatpush1.msra.mxu0 %v29
    %76 = vmatprep.subr.mxu0 0.0
    %77 = vmatpush1.msra.mxu0 %v30
    %78 = vmatprep.subr.mxu0 0.0
    %79 = vmatpush1.msra.mxu0 %v31
    %80 = vmatprep.subr.mxu0 0.0
    %81 = vmatpush1.msra.mxu0 %v32
    %82 = vmatprep.subr.mxu0 0.0
    %83 = vmatpush1.msra.mxu0 %v33
    %84 = vmatprep.subr.mxu0 0.0
    %85 = vmatpush1.msra.mxu0 %v34
    %86 = vmatprep.subr.mxu0 0.0
    %87 = vmatpush1.msra.mxu0 %v35
    %88 = vmatprep.subr.mxu0 0.0
    %89 = vmatpush1.msra.mxu0 %v36
    %90 = vmatprep.subr.mxu0 0.0
    %91 = vmatpush1.msra.mxu0 %v37
    %92 = vmatprep.subr.mxu0 0.0
    %93 = vmatpush1.msra.mxu0 %v38
    %94 = vmatprep.subr.mxu0 0.0
    %95 = vmatpush1.msra.mxu0 %v39
    %96 = vmatprep.subr.mxu0 0.0
    %97 = vmatpush1.msra.mxu0 %v40
    %98 = vmatprep.subr.mxu0 0.0
    %99 = vmatpush1.msra.mxu0 %v41
    %100 = vmatprep.subr.mxu0 0.0
    %101 = vmatpush1.msra.mxu0 %v42
    %102 = vmatprep.subr.mxu0 0.0
    %103 = vmatpush1.msra.mxu0 %v43
    %104 = vmatprep.subr.mxu0 0.0
    %105 = vmatpush1.msra.mxu0 %v44
    %106 = vmatprep.subr.mxu0 0.0
    %107 = vmatpush1.msra.mxu0 %v45
    %108 = vmatprep.subr.mxu0 0.0
    %109 = vmatpush1.msra.mxu0 %v46
    %110 = vmatprep.subr.mxu0 0.0
    %111 = vmatpush1.msra.mxu0 %v47
    %112 = vmatprep.mubr.f32.mxu0 %v15
    %113 = vmatmul.mubr.f32.gmra.mrb[0].mxu0 %v14
    %v114 = vpop.f32.mrb[0].mxu0
    %v115 = vadd.f32 0.0, %v114
    %v116 = vpop.f32.mrb[0].mxu0
    %117 = vdwg.mxu0
    %v118 = vrsqrt.pop %v115
    %v119 = vmul.f32 %v115, %v118
    %vm120 = vcmp.eq.f32.partialorder %v115, inf
    %v121 = vsel %vm120, %v115, %v119
    %vm122 = vcmp.eq.f32.partialorder %v115, 0.0
    %v123 = vand.u32 %v115, 2147483648
    %v124 = vsel %vm122, %v123, %v121
    %vm125 = vcmask 400384
    %126 = vst.msk [vmem:[#allocation2] sm:$0xff] %vm125, %v124
    // Predicated region
    $region10: #{tpu_custom_call.1} parent=1 // pred_check
      _
    $region11: #{tpu_custom_call.1} parent=1 // pred_check_branch
      %128 = sbr.rel (0) target = $region13
    $region12: #{tpu_custom_call.1} parent=1 // pred_region
      %s130 = ssub.s32 128, 128
      %131 = vsyncadd [#allocation3], %s130
      %s133 = sshll.u32 [#allocation2], 4
      %s134 = int_to_ptr.vmem [resolvable:$true] %s133
      %136 = dma.vmem_to_hbm [thread:$0]  %s134, 128, %s2, [#allocation3]
    $region13: #{tpu_custom_call.1} parent=1 // pred_fallthru
      _
    // Predicated region
    $region14: #{tpu_custom_call.1} parent=1 // pred_check
      _
    $region15: #{tpu_custom_call.1} parent=1 // pred_check_branch
      %138 = sbr.rel (0) target = $region17
    $region16: #{tpu_custom_call.1} parent=1 // pred_region
      %139 = dma.done [#allocation3], 128
    $region17: #{tpu_custom_call.1} parent=1 // pred_fallthru
      _
    %140 = vsyncpa [#allocation3], 1

</llo_original>
